<compile_context>
chip_gen: v7x
topology: tpu7x:2x2x1
jax: 0.10.0
libtpu: 0.0.40
codegen_flags: <defaults>
</compile_context>

<pallas_src>
import functools
import math

import jax
import jax.numpy as jnp
from jax.experimental import pallas as pl
from jax.experimental.pallas import tpu as pltpu


# ----------------------------------------------------------------------------
# helpers
# ----------------------------------------------------------------------------
def _round_up(x, m):
    return ((x + m - 1) // m) * m


def _pick_tile(dim, base_tile, granule):
    """Return (padded_dim, tile): tile divides padded_dim, tile % granule == 0."""
    padded = _round_up(dim, granule)
    if padded <= base_tile:
        return padded, padded
    tile = _round_up(base_tile, granule)
    return _round_up(dim, tile), tile


def _pad2d(x, rows, cols):
    r, c = x.shape
    if r == rows and c == cols:
        return x
    return jnp.pad(x, ((0, rows - r), (0, cols - c)))


@functools.lru_cache(maxsize=None)
def _vmem_limit_bytes():
    """Generation-aware scoped-VMEM budget (leave headroom for Mosaic scratch)."""
    cap = 64 * 1024 * 1024
    try:
        cap = int(getattr(pltpu.get_tpu_info(), "vmem_capacity_bytes", cap))
    except Exception:
        pass
    # v5e/v6e (128 MiB) -> 96 MiB ; v7x (64 MiB / TensorCore) -> 48 MiB
    return max(32 * 1024 * 1024, min((cap * 3) // 4, 96 * 1024 * 1024))


def _default_tiles():
    """Tile sizes per generation: deeper K reuse on 128 MiB-VMEM chips."""
    if _vmem_limit_bytes() >= 90 * 1024 * 1024:   # v5e / v6e
        return 512, 512, 1024
    return 512, 512, 512                          # v7x (64 MiB per TC)


_STACK_TM_THRESHOLD = 256  # below this, stack lb/ub LHS along sublanes


# ----------------------------------------------------------------------------
# Kernel 1: tiled fused lower/upper sign-split matmul
#   o_lb = relu(c_lb) @ a - relu(-c_lb) @ b
#   o_ub = relu(c_ub) @ b - relu(-c_ub) @ a
# Grid (M//tm, N//tn, K//tk); K innermost with f32 VMEM accumulators.
# ----------------------------------------------------------------------------
def _make_resolve_kernel(stack_lhs):
    def kernel(clb_ref, cub_ref, a_ref, b_ref, olb_ref, oub_ref, acc_lb, acc_ub):
        @pl.when(pl.program_id(2) == 0)
        def _init():
            acc_lb[...] = jnp.zeros_like(acc_lb)
            acc_ub[...] = jnp.zeros_like(acc_ub)

        clb = clb_ref[...]
        cub = cub_ref[...]
        a = a_ref[...]
        b = b_ref[...]
        clb_pos = jnp.maximum(clb, 0.0)
        clb_neg = jnp.maximum(-clb, 0.0)
        cub_pos = jnp.maximum(cub, 0.0)
        cub_neg = jnp.maximum(-cub, 0.0)

        if stack_lhs:
            # Small-M path: stack LHS along sublanes -> 2 dots cover both
            # bounds, doubling MXU row occupancy and halving RHS pushes.
            tm = clb.shape[0]
            lhs_a = jnp.concatenate([clb_pos, cub_neg], axis=0)
            lhs_b = jnp.concatenate([clb_neg, cub_pos], axis=0)
            ra = jnp.dot(lhs_a, a, preferred_element_type=jnp.float32)
            rb = jnp.dot(lhs_b, b, preferred_element_type=jnp.float32)
            acc_lb[...] += ra[:tm] - rb[:tm]
            acc_ub[...] += rb[tm:] - ra[tm:]
        else:
            # Group dots by shared RHS (MXU weights stay stationary) and
            # accumulate in place (no dot-minus-dot temporaries).
            acc_lb[...] += jnp.dot(clb_pos, a, preferred_element_type=jnp.float32)
            acc_ub[...] -= jnp.dot(cub_neg, a, preferred_element_type=jnp.float32)
            acc_ub[...] += jnp.dot(cub_pos, b, preferred_element_type=jnp.float32)
            acc_lb[...] -= jnp.dot(clb_neg, b, preferred_element_type=jnp.float32)

        @pl.when(pl.program_id(2) == pl.num_programs(2) - 1)
        def _finalize():
            olb_ref[...] = acc_lb[...]
            oub_ref[...] = acc_ub[...]

    return kernel


def dp_resolve_fused(c_lb, c_ub, a, b, *, tm=None, tn=None, tk=None):
    """Fused lower/upper sign-split matmul on TPU (tiled, scales to any size).

    Returns (o_lb, o_ub). Operands are zero-padded to tile-aligned shapes,
    which is sound for DeepPoly (relu(0) * x == 0).
    """
    c_lb = c_lb.astype(jnp.float32)
    c_ub = c_ub.astype(jnp.float32)
    a = a.astype(jnp.float32)
    b = b.astype(jnp.float32)

    m, k = c_lb.shape
    assert c_ub.shape == (m, k)
    k2, n = a.shape
    assert k2 == k and b.shape == (k, n)

    dtm, dtn, dtk = _default_tiles()
    tm = dtm if tm is None else tm
    tn = dtn if tn is None else tn
    tk = dtk if tk is None else tk

    mp, tm = _pick_tile(m, tm, 8)      # sublane granule
    np_, tn = _pick_tile(n, tn, 128)   # lane granule (lane-dense stores)
    kp, tk = _pick_tile(k, tk, 128)    # lane granule for C, sublane-safe for a/b

    c_lb_p = _pad2d(c_lb, mp, kp)
    c_ub_p = _pad2d(c_ub, mp, kp)
    a_p = _pad2d(a, kp, np_)
    b_p = _pad2d(b, kp, np_)

    grid = (mp // tm, np_ // tn, kp // tk)
    stack_lhs = tm < _STACK_TM_THRESHOLD

    # TODO(synk): on v7x, when (M//tm)*(N//tn) == 1 the two parallel axes give
    # megacore nothing; a per-core K split with a final add could ~2x that case.
    o_lb_p, o_ub_p = pl.pallas_call(
        _make_resolve_kernel(stack_lhs),
        out_shape=(
            jax.ShapeDtypeStruct((mp, np_), jnp.float32),
            jax.ShapeDtypeStruct((mp, np_), jnp.float32),
        ),
        grid=grid,
        in_specs=[
            pl.BlockSpec((tm, tk), lambda i, j, kk: (i, kk)),   # c_lb
            pl.BlockSpec((tm, tk), lambda i, j, kk: (i, kk)),   # c_ub
            pl.BlockSpec((tk, tn), lambda i, j, kk: (kk, j)),   # a (slb)
            pl.BlockSpec((tk, tn), lambda i, j, kk: (kk, j)),   # b (sub)
        ],
        out_specs=[
            pl.BlockSpec((tm, tn), lambda i, j, kk: (i, j)),
            pl.BlockSpec((tm, tn), lambda i, j, kk: (i, j)),
        ],
        scratch_shapes=[
            pltpu.VMEM((tm, tn), jnp.float32),
            pltpu.VMEM((tm, tn), jnp.float32),
        ],
        compiler_params=pltpu.CompilerParams(
            dimension_semantics=("parallel", "parallel", "arbitrary"),
            vmem_limit_bytes=_vmem_limit_bytes(),
        ),
    )(c_lb_p, c_ub_p, a_p, b_p)

    return o_lb_p[:m, :n], o_ub_p[:m, :n]


# ----------------------------------------------------------------------------
# Kernel 2: layer-0 "box" resolve (concretization) on the VPU
#   o_lb = sum(relu(C_lb) * lb - relu(-C_lb) * ub, axis=-1)
#   o_ub = sum(relu(C_ub) * ub - relu(-C_ub) * lb, axis=-1)
# Avoids a 1-wide MXU matmul against a 128-lane-padded column vector.
# ----------------------------------------------------------------------------
def _concretize_kernel(clb_ref, cub_ref, lb_ref, ub_ref,
                       olb_ref, oub_ref, acc_lb, acc_ub):
    @pl.when(pl.program_id(1) == 0)
    def _init():
        acc_lb[...] = jnp.zeros_like(acc_lb)
        acc_ub[...] = jnp.zeros_like(acc_ub)

    clb = clb_ref[...]
    cub = cub_ref[...]
    lb = lb_ref[...]   # (1, tk) -> broadcasts over sublanes
    ub = ub_ref[...]

    acc_lb[...] += jnp.sum(jnp.maximum(clb, 0.0) * lb - jnp.maximum(-clb, 0.0) * ub,
                           axis=-1, keepdims=True)
    acc_ub[...] += jnp.sum(jnp.maximum(cub, 0.0) * ub - jnp.maximum(-cub, 0.0) * lb,
                           axis=-1, keepdims=True)

    @pl.when(pl.program_id(1) == pl.num_programs(1) - 1)
    def _finalize():
        olb_ref[...] = acc_lb[...]
        oub_ref[...] = acc_ub[...]


def dp_concretize(c_lb, c_ub, lb_vec, ub_vec, *, tm=512, tk=1024):
    """Concretize symbolic bounds against the (augmented) input box vectors."""
    c_lb = c_lb.astype(jnp.float32)
    c_ub = c_ub.astype(jnp.float32)
    lb_vec = lb_vec.astype(jnp.float32)
    ub_vec = ub_vec.astype(jnp.float32)

    m, k = c_lb.shape
    assert c_ub.shape == (m, k) and lb_vec.shape == (k,) and ub_vec.shape == (k,)

    mp, tm = _pick_tile(m, tm, 8)
    kp, tk = _pick_tile(k, tk, 128)

    c_lb_p = _pad2d(c_lb, mp, kp)
    c_ub_p = _pad2d(c_ub, mp, kp)
    lb_p = _pad2d(lb_vec[None, :], 1, kp)
    ub_p = _pad2d(ub_vec[None, :], 1, kp)

    grid = (mp // tm, kp // tk)

    o_lb, o_ub = pl.pallas_call(
        _concretize_kernel,
        out_shape=(
            jax.ShapeDtypeStruct((mp, 1), jnp.float32),
            jax.ShapeDtypeStruct((mp, 1), jnp.float32),
        ),
        grid=grid,
        in_specs=[
            pl.BlockSpec((tm, tk), lambda i, kk: (i, kk)),
            pl.BlockSpec((tm, tk), lambda i, kk: (i, kk)),
            pl.BlockSpec((1, tk), lambda i, kk: (0, kk)),
            pl.BlockSpec((1, tk), lambda i, kk: (0, kk)),
        ],
        out_specs=[
            pl.BlockSpec((tm, 1), lambda i, kk: (i, 0)),
            pl.BlockSpec((tm, 1), lambda i, kk: (i, 0)),
        ],
        scratch_shapes=[
            pltpu.VMEM((tm, 1), jnp.float32),
            pltpu.VMEM((tm, 1), jnp.float32),
        ],
        compiler_params=pltpu.CompilerParams(
            dimension_semantics=("parallel", "arbitrary"),
            vmem_limit_bytes=_vmem_limit_bytes(),
        ),
    )(c_lb_p, c_ub_p, lb_p, ub_p)

    return o_lb[:m, 0], o_ub[:m, 0]


# ----------------------------------------------------------------------------
# Kernel 3: the whole symbolic back-substitution chain in ONE pallas_call.
# Grid = (num_layers,), sequential ("arbitrary"); running C_lb/C_ub live in
# VMEM scratch between steps; each step's slab is auto-pipelined from HBM.
# ----------------------------------------------------------------------------
def _make_multilayer_kernel(stack_lhs):
    def kernel(cinit_lb_ref, cinit_ub_ref, slb_ref, sub_ref,
               olb_ref, oub_ref, c_lb, c_ub):
        step = pl.program_id(0)

        @pl.when(step == 0)
        def _init():
            c_lb[...] = cinit_lb_ref[...]
            c_ub[...] = cinit_ub_ref[...]

        a = slb_ref[...]
        b = sub_ref[...]
        clb = c_lb[...]
        cub = c_ub[...]
        clb_pos = jnp.maximum(clb, 0.0)
        clb_neg = jnp.maximum(-clb, 0.0)
        cub_pos = jnp.maximum(cub, 0.0)
        cub_neg = jnp.maximum(-cub, 0.0)

        if stack_lhs:
            m = clb.shape[0]
            lhs_a = jnp.concatenate([clb_pos, cub_neg], axis=0)
            lhs_b = jnp.concatenate([clb_neg, cub_pos], axis=0)
            ra = jnp.dot(lhs_a, a, preferred_element_type=jnp.float32)
            rb = jnp.dot(lhs_b, b, preferred_element_type=jnp.float32)
            new_lb = ra[:m] - rb[:m]
            new_ub = rb[m:] - ra[m:]
        else:
            pa_lb = jnp.dot(clb_pos, a, preferred_element_type=jnp.float32)
            pa_ub = jnp.dot(cub_neg, a, preferred_element_type=jnp.float32)
            pb_ub = jnp.dot(cub_pos, b, preferred_element_type=jnp.float32)
            pb_lb = jnp.dot(clb_neg, b, preferred_element_type=jnp.float32)
            new_lb = pa_lb - pb_lb
            new_ub = pb_ub - pa_ub

        c_lb[...] = new_lb
        c_ub[...] = new_ub

        @pl.when(step == pl.num_programs(0) - 1)
        def _finalize():
            olb_ref[...] = new_lb
            oub_ref[...] = new_ub

    return kernel


def dp_backsub_fused_layers(c_lb0, c_ub0, slabs):
    """Apply the sign-split resolve through `slabs` (list of (slb_aug, sub_aug),
    in application order) with the running bounds resident in VMEM.

    Falls back to per-layer tiled `dp_resolve_fused` calls if the resident
    working set would not fit the VMEM budget.
    """
    c_lb0 = c_lb0.astype(jnp.float32)
    c_ub0 = c_ub0.astype(jnp.float32)
    assert len(slabs) >= 1

    m, k0 = c_lb0.shape
    dims = [k0]
    for s, t in slabs:
        dims.extend(s.shape)
        dims.extend(t.shape)
    kmax_p = _round_up(max(dims), 128)
    mp = _round_up(m, 8)

    # conservative VMEM working-set estimate (C residents, in/out blocks,
    # slab double-buffers, relu/dot/stack temporaries)
    need = 4 * (24 * mp * kmax_p + 4 * kmax_p * kmax_p)
    if need > (_vmem_limit_bytes() * 7) // 10:
        c_lb, c_ub = c_lb0, c_ub0
        for a, b in slabs:
            c_lb, c_ub = dp_resolve_fused(c_lb, c_ub, a, b)
        return c_lb, c_ub

    n_steps = len(slabs)
    slb_stack = jnp.stack([_pad2d(s.astype(jnp.float32), kmax_p, kmax_p)
                           for s, _ in slabs])
    sub_stack = jnp.stack([_pad2d(t.astype(jnp.float32), kmax_p, kmax_p)
                           for _, t in slabs])
    c_lb_p = _pad2d(c_lb0, mp, kmax_p)
    c_ub_p = _pad2d(c_ub0, mp, kmax_p)
    stack_lhs = mp < _STACK_TM_THRESHOLD

    out_lb, out_ub = pl.pallas_call(
        _make_multilayer_kernel(stack_lhs),
        out_shape=(
            jax.ShapeDtypeStruct((mp, kmax_p), jnp.float32),
            jax.ShapeDtypeStruct((mp, kmax_p), jnp.float32),
        ),
        grid=(n_steps,),
        in_specs=[
            pl.BlockSpec((mp, kmax_p), lambda s: (0, 0)),           # init C_lb
            pl.BlockSpec((mp, kmax_p), lambda s: (0, 0)),           # init C_ub
            pl.BlockSpec((None, kmax_p, kmax_p), lambda s: (s, 0, 0)),  # slb_s
            pl.BlockSpec((None, kmax_p, kmax_p), lambda s: (s, 0, 0)),  # sub_s
        ],
        out_specs=[
            pl.BlockSpec((mp, kmax_p), lambda s: (0, 0)),
            pl.BlockSpec((mp, kmax_p), lambda s: (0, 0)),
        ],
        scratch_shapes=[
            pltpu.VMEM((mp, kmax_p), jnp.float32),
            pltpu.VMEM((mp, kmax_p), jnp.float32),
        ],
        compiler_params=pltpu.CompilerParams(
            dimension_semantics=("arbitrary",),
            vmem_limit_bytes=_vmem_limit_bytes(),
        ),
    )(c_lb_p, c_ub_p, slb_stack, sub_stack)

    n_last = slabs[-1][0].shape[1]
    return out_lb[:m, :n_last], out_ub[:m, :n_last]


# ----------------------------------------------------------------------------
# Minimal JAX port of the DeepPoly abstract element used by DPLinear.
# ----------------------------------------------------------------------------
class DeepPoly:
    def __init__(self, lb, ub):
        n = lb.shape[0]
        init = jnp.concatenate(
            [jnp.eye(n, dtype=jnp.float32), jnp.zeros((n, 1), jnp.float32)], axis=1
        )
        self.lb = lb.astype(jnp.float32)
        self.ub = ub.astype(jnp.float32)
        self.slb = init
        self.sub = init
        self.history = []   # ("box", lb_aug_vec, ub_aug_vec) or ("sym", slb_aug, sub_aug)
        self.layers = 0
        self.is_relu = False

    def save(self):
        """Save this layer's constraints, pre-augmented (hoisted out of resolve)."""
        if self.layers == 0:
            one = jnp.ones((1,), jnp.float32)
            self.history.append(("box",
                                 jnp.concatenate([self.lb, one]),
                                 jnp.concatenate([self.ub, one])))
        else:
            keep = jnp.zeros((1, self.slb.shape[1]), jnp.float32).at[0, -1].set(1.0)
            self.history.append(("sym",
                                 jnp.concatenate([self.slb, keep], axis=0),
                                 jnp.concatenate([self.sub, keep], axis=0)))
        self.layers += 1
        return self

    def resolve_both(self, c_lb, c_ub, layer):
        """Fused lower/upper substitution of (c_lb, c_ub) through `layer`."""
        kind, a, b = self.history[layer]
        if kind == "box":
            return dp_concretize(c_lb, c_ub, a, b)
        return dp_resolve_fused(c_lb, c_ub, a, b)
        # TODO(synk): ReLU-layer resolve (diagonal relaxation) belongs to DPReLU
        # and is not exercised by DPLinear; only affine layers are composed here.

    def resolve(self, constrains, layer, lower=True):
        """API-parity single-bound resolve (fast paths use resolve_both / fused loop)."""
        o_lb, o_ub = self.resolve_both(constrains, constrains, layer)
        return o_lb if lower else o_ub


# ----------------------------------------------------------------------------
# DPLinear: faithful port of the PyTorch module's forward.
# ----------------------------------------------------------------------------
class DPLinear:
    def __init__(self, weight, bias):
        self.weight = jnp.asarray(weight, jnp.float32)   # (out_features, in_features)
        self.bias = jnp.asarray(bias, jnp.float32)       # (out_features,)
        self.in_features = self.weight.shape[1]
        self.out_features = self.weight.shape[0]

    def forward(self, x: DeepPoly) -> DeepPoly:
        x.save()
        init_slb = jnp.concatenate([self.weight, self.bias[:, None]], axis=1)
        x.lb = init_slb
        x.ub = init_slb
        x.slb = init_slb
        x.sub = init_slb

        c_lb = init_slb
        c_ub = init_slb

        # symbolic layers (layers-1 .. 1), applied in reverse history order,
        # fused into a single VMEM-resident kernel when they fit.
        sym_slabs = []
        for i in range(x.layers - 1, 0, -1):
            _, a, b = x.history[i]
            sym_slabs.append((a, b))
        if sym_slabs:
            c_lb, c_ub = dp_backsub_fused_layers(c_lb, c_ub, sym_slabs)

        # layer 0: concrete input box -> concretization kernel (VPU reduce).
        _, lb_vec, ub_vec = x.history[0]
        x.lb, x.ub = dp_concretize(c_lb, c_ub, lb_vec, ub_vec)
        x.is_relu = False
        return x


# ----------------------------------------------------------------------------
# Pure-JAX references (correctness checks only).
# ----------------------------------------------------------------------------
def _ref_resolve(c, a, b):
    hp = jax.lax.Precision.HIGHEST
    return (jnp.dot(jnp.maximum(c, 0.0), a, precision=hp)
            - jnp.dot(jnp.maximum(-c, 0.0), b, precision=hp))


def _ref_forward_chain(weights, biases, lb0, ub0):
    """Plain-JAX replica of the DeepPoly + DPLinear pipeline (torch semantics)."""
    one = jnp.ones((1,), jnp.float32)
    lb_col = jnp.concatenate([lb0, one])[:, None]
    ub_col = jnp.concatenate([ub0, one])[:, None]
    history = [("box", lb_col, ub_col)]
    slb = sub = None
    lb = ub = None
    for w, b in zip(weights, biases):
        if slb is not None:
            keep = jnp.zeros((1, slb.shape[1]), jnp.float32).at[0, -1].set(1.0)
            history.append(("sym",
                            jnp.concatenate([slb, keep], axis=0),
                            jnp.concatenate([sub, keep], axis=0)))
        init = jnp.concatenate([w, b[:, None]], axis=1)
        slb = sub = init
        c_lb = c_ub = init
        for _, a, bb in reversed(history):
            c_lb, c_ub = _ref_resolve(c_lb, a, bb), _ref_resolve(c_ub, bb, a)
        lb, ub = c_lb[:, 0], c_ub[:, 0]
    return lb, ub


if __name__ == "__main__":
    key = jax.random.PRNGKey(0)
    keys = jax.random.split(key, 7)

    # small deterministic chain: 24 -> 48 -> 10 -> 12 (3 DPLinear layers)
    n0, n1, n2, n3 = 24, 48, 10, 12
    eps = 0.1

    x0 = jax.random.normal(keys[0], (n0,), jnp.float32)
    lb0, ub0 = x0 - eps, x0 + eps

    def linear_init(kw, kb, fan_out, fan_in):
        bound = 1.0 / math.sqrt(fan_in)
        w = jax.random.uniform(kw, (fan_out, fan_in), jnp.float32, -bound, bound)
        b = jax.random.uniform(kb, (fan_out,), jnp.float32, -bound, bound)
        return w, b

    w1, b1 = linear_init(keys[1], keys[2], n1, n0)
    w2, b2 = linear_init(keys[3], keys[4], n2, n1)
    w3, b3 = linear_init(keys[5], keys[6], n3, n2)

    # DeepPoly pipeline: input box -> DPLinear x3
    dp = DeepPoly(lb0, ub0)
    dp = DPLinear(w1, b1).forward(dp)
    lb1_out, ub1_out = jax.block_until_ready((dp.lb, dp.ub))
    dp = DPLinear(w2, b2).forward(dp)
    dp = DPLinear(w3, b3).forward(dp)
    lb, ub = jax.block_until_ready((dp.lb, dp.ub))

    lb_ref1, ub_ref1 = _ref_forward_chain([w1], [b1], lb0, ub0)
    lb_ref, ub_ref = _ref_forward_chain([w1, w2, w3], [b1, b2, b3], lb0, ub0)

    assert lb1_out.shape == (n1,) and ub1_out.shape == (n1,)
    assert lb.shape == (n3,) and ub.shape == (n3,)
    assert jnp.allclose(lb1_out, lb_ref1, atol=1e-4, rtol=1e-4)
    assert jnp.allclose(ub1_out, ub_ref1, atol=1e-4, rtol=1e-4)
    assert jnp.allclose(lb, lb_ref, atol=1e-4, rtol=1e-4)
    assert jnp.allclose(ub, ub_ref, atol=1e-4, rtol=1e-4)
    assert bool(jnp.all(lb <= ub + 1e-6))

    # Tiled kernel, multi-tile M/N/K (non-stacked AND stacked small-tm paths),
    # with sign-split exercised via a != b.
    km = jax.random.split(jax.random.PRNGKey(1), 4)
    C_lb = jax.random.normal(km[0], (300, 600), jnp.float32)
    C_ub = jax.random.normal(km[1], (300, 600), jnp.float32)
    A = jax.random.normal(km[2], (600, 260), jnp.float32)
    B = jax.random.normal(km[3], (600, 260), jnp.float32)
    o_lb_ref = _ref_resolve(C_lb, A, B)
    o_ub_ref = _ref_resolve(C_ub, B, A)
    o_lb, o_ub = jax.block_until_ready(dp_resolve_fused(C_lb, C_ub, A, B))
    assert jnp.allclose(o_lb, o_lb_ref, atol=1e-3, rtol=1e-3)
    assert jnp.allclose(o_ub, o_ub_ref, atol=1e-3, rtol=1e-3)
    o_lb, o_ub = jax.block_until_ready(
        dp_resolve_fused(C_lb, C_ub, A, B, tm=128, tn=128, tk=256))
    assert jnp.allclose(o_lb, o_lb_ref, atol=1e-3, rtol=1e-3)
    assert jnp.allclose(o_ub, o_ub_ref, atol=1e-3, rtol=1e-3)

    # Fused multi-layer back-substitution kernel vs reference (slb != sub).
    ks = jax.random.split(jax.random.PRNGKey(2), 6)
    C0 = jax.random.normal(ks[0], (20, 40), jnp.float32)
    D0 = jax.random.normal(ks[1], (20, 40), jnp.float32)
    A1 = jax.random.normal(ks[2], (40, 33), jnp.float32)
    B1 = jax.random.normal(ks[3], (40, 33), jnp.float32)
    A2 = jax.random.normal(ks[4], (33, 57), jnp.float32)
    B2 = jax.random.normal(ks[5], (33, 57), jnp.float32)
    f_lb, f_ub = jax.block_until_ready(
        dp_backsub_fused_layers(C0, D0, [(A1, B1), (A2, B2)]))
    r_lb, r_ub = C0, D0
    for aa, bb in [(A1, B1), (A2, B2)]:
        r_lb, r_ub = _ref_resolve(r_lb, aa, bb), _ref_resolve(r_ub, bb, aa)
    assert jnp.allclose(f_lb, r_lb, atol=1e-3, rtol=1e-3)
    assert jnp.allclose(f_ub, r_ub, atol=1e-3, rtol=1e-3)

    # Concretization kernel, multi-tile M and K.
    kc = jax.random.split(jax.random.PRNGKey(3), 4)
    Cl = jax.random.normal(kc[0], (200, 300), jnp.float32)
    Cu = jax.random.normal(kc[1], (200, 300), jnp.float32)
    lbv = jax.random.normal(kc[2], (300,), jnp.float32)
    ubv = lbv + jnp.abs(jax.random.normal(kc[3], (300,), jnp.float32))
    clb, cub = jax.block_until_ready(dp_concretize(Cl, Cu, lbv, ubv, tm=64, tk=256))
    clb_ref = _ref_resolve(Cl, lbv[:, None], ubv[:, None])[:, 0]
    cub_ref = _ref_resolve(Cu, ubv[:, None], lbv[:, None])[:, 0]
    assert jnp.allclose(clb, clb_ref, atol=1e-3, rtol=1e-3)
    assert jnp.allclose(cub, cub_ref, atol=1e-3, rtol=1e-3)

    print("KERNEL_OK")
</pallas_src>

<mosaic_0001>
module attributes {stable_mosaic.version = 11 : i64} {
  func.func @_concretize_kernel(%arg0: i32, %arg1: i32, %arg2: memref<48x128xf32, #tpu.memory_space<vmem>>, %arg3: memref<48x128xf32, #tpu.memory_space<vmem>>, %arg4: memref<1x128xf32, #tpu.memory_space<vmem>>, %arg5: memref<1x128xf32, #tpu.memory_space<vmem>>, %arg6: memref<48x1xf32, #tpu.memory_space<vmem>>, %arg7: memref<48x1xf32, #tpu.memory_space<vmem>>, %arg8: memref<48x1xf32, #tpu.memory_space<vmem>>, %arg9: memref<48x1xf32, #tpu.memory_space<vmem>>) attributes {dimension_semantics = [#tpu.dimension_semantics<parallel>, #tpu.dimension_semantics<arbitrary>], iteration_bounds = array<i64: 1, 1>, scalar_prefetch = 0 : i64, scratch_operands = 2 : i64, tpu.core_type = #tpu.core_type<tc>, window_params = [{transform_indices = @transform_0, window_bounds = array<i64: 48, 128>}, {transform_indices = @transform_1, window_bounds = array<i64: 48, 128>}, {transform_indices = @transform_2, window_bounds = array<i64: 1, 128>}, {transform_indices = @transform_3, window_bounds = array<i64: 1, 128>}, {transform_indices = @transform_4, window_bounds = array<i64: 48, 1>}, {transform_indices = @transform_5, window_bounds = array<i64: 48, 1>}]} {
    %c0_i32 = arith.constant 0 : i32
    %0 = arith.cmpi eq, %arg1, %c0_i32 : i32
    %1 = arith.extui %0 : i1 to i32
    %c0_i32_0 = arith.constant 0 : i32
    %2 = arith.cmpi ne, %1, %c0_i32_0 : i32
    scf.if %2 {
      %cst_25 = arith.constant 0.000000e+00 : f32
      %42 = vector.broadcast %cst_25 : f32 to vector<48x1xf32>
      %c0_26 = arith.constant 0 : index
      %c0_27 = arith.constant 0 : index
      %43 = vector.load %arg8[%c0_26, %c0_27] : memref<48x1xf32, #tpu.memory_space<vmem>>, vector<48x1xf32>
      tpu.vector_store %arg8[%c0_26, %c0_27], %42 {strides = array<i32>} : memref<48x1xf32, #tpu.memory_space<vmem>>, vector<48x1xf32>,
      %cst_28 = arith.constant 0.000000e+00 : f32
      %44 = vector.broadcast %cst_28 : f32 to vector<48x1xf32>
      %c0_29 = arith.constant 0 : index
      %c0_30 = arith.constant 0 : index
      %45 = vector.load %arg9[%c0_29, %c0_30] : memref<48x1xf32, #tpu.memory_space<vmem>>, vector<48x1xf32>
      tpu.vector_store %arg9[%c0_29, %c0_30], %44 {strides = array<i32>} : memref<48x1xf32, #tpu.memory_space<vmem>>, vector<48x1xf32>,
    } else {
    }
    %c0 = arith.constant 0 : index
    %c0_1 = arith.constant 0 : index
    %3 = vector.load %arg2[%c0, %c0_1] : memref<48x128xf32, #tpu.memory_space<vmem>>, vector<48x128xf32>
    %c0_2 = arith.constant 0 : index
    %c0_3 = arith.constant 0 : index
    %4 = vector.load %arg3[%c0_2, %c0_3] : memref<48x128xf32, #tpu.memory_space<vmem>>, vector<48x128xf32>
    %c0_4 = arith.constant 0 : index
    %c0_5 = arith.constant 0 : index
    %5 = vector.load %arg4[%c0_4, %c0_5] : memref<1x128xf32, #tpu.memory_space<vmem>>, vector<1x128xf32>
    %c0_6 = arith.constant 0 : index
    %c0_7 = arith.constant 0 : index
    %6 = vector.load %arg5[%c0_6, %c0_7] : memref<1x128xf32, #tpu.memory_space<vmem>>, vector<1x128xf32>
    %c0_8 = arith.constant 0 : index
    %c0_9 = arith.constant 0 : index
    %7 = vector.load %arg8[%c0_8, %c0_9] : memref<48x1xf32, #tpu.memory_space<vmem>>, vector<48x1xf32>
    %cst = arith.constant 0.000000e+00 : f32
    %8 = vector.broadcast %cst : f32 to vector<48x128xf32>
    %9 = arith.maximumf %3, %8 : vector<48x128xf32>
    %10 = vector.broadcast %5 : vector<1x128xf32> to vector<48x128xf32>
    %11 = arith.mulf %9, %10 : vector<48x128xf32>
    %cst_10 = arith.constant 0.000000e+00 : f32
    %12 = vector.broadcast %cst_10 : f32 to vector<48x128xf32>
    %13 = arith.subf %12, %3 : vector<48x128xf32>
    %cst_11 = arith.constant 0.000000e+00 : f32
    %14 = vector.broadcast %cst_11 : f32 to vector<48x128xf32>
    %15 = arith.maximumf %13, %14 : vector<48x128xf32>
    %16 = vector.broadcast %6 : vector<1x128xf32> to vector<48x128xf32>
    %17 = arith.mulf %15, %16 : vector<48x128xf32>
    %18 = arith.subf %11, %17 : vector<48x128xf32>
    %cst_12 = arith.constant dense<0.000000e+00> : vector<48xf32>
    %19 = vector.multi_reduction <add>, %18, %cst_12 [1] : vector<48x128xf32> to vector<48xf32>
    %20 = vector.shape_cast %19 : vector<48xf32> to vector<48x1xf32>
    %21 = arith.addf %7, %20 : vector<48x1xf32>
    %c0_13 = arith.constant 0 : index
    %c0_14 = arith.constant 0 : index
    %22 = vector.load %arg8[%c0_13, %c0_14] : memref<48x1xf32, #tpu.memory_space<vmem>>, vector<48x1xf32>
    tpu.vector_store %arg8[%c0_13, %c0_14], %21 {strides = array<i32>} : memref<48x1xf32, #tpu.memory_space<vmem>>, vector<48x1xf32>,
    %c0_15 = arith.constant 0 : index
    %c0_16 = arith.constant 0 : index
    %23 = vector.load %arg9[%c0_15, %c0_16] : memref<48x1xf32, #tpu.memory_space<vmem>>, vector<48x1xf32>
    %cst_17 = arith.constant 0.000000e+00 : f32
    %24 = vector.broadcast %cst_17 : f32 to vector<48x128xf32>
    %25 = arith.maximumf %4, %24 : vector<48x128xf32>
    %26 = vector.broadcast %6 : vector<1x128xf32> to vector<48x128xf32>
    %27 = arith.mulf %25, %26 : vector<48x128xf32>
    %cst_18 = arith.constant 0.000000e+00 : f32
    %28 = vector.broadcast %cst_18 : f32 to vector<48x128xf32>
    %29 = arith.subf %28, %4 : vector<48x128xf32>
    %cst_19 = arith.constant 0.000000e+00 : f32
    %30 = vector.broadcast %cst_19 : f32 to vector<48x128xf32>
    %31 = arith.maximumf %29, %30 : vector<48x128xf32>
    %32 = vector.broadcast %5 : vector<1x128xf32> to vector<48x128xf32>
    %33 = arith.mulf %31, %32 : vector<48x128xf32>
    %34 = arith.subf %27, %33 : vector<48x128xf32>
    %cst_20 = arith.constant dense<0.000000e+00> : vector<48xf32>
    %35 = vector.multi_reduction <add>, %34, %cst_20 [1] : vector<48x128xf32> to vector<48xf32>
    %36 = vector.shape_cast %35 : vector<48xf32> to vector<48x1xf32>
    %37 = arith.addf %23, %36 : vector<48x1xf32>
    %c0_21 = arith.constant 0 : index
    %c0_22 = arith.constant 0 : index
    %38 = vector.load %arg9[%c0_21, %c0_22] : memref<48x1xf32, #tpu.memory_space<vmem>>, vector<48x1xf32>
    tpu.vector_store %arg9[%c0_21, %c0_22], %37 {strides = array<i32>} : memref<48x1xf32, #tpu.memory_space<vmem>>, vector<48x1xf32>,
    %c0_i32_23 = arith.constant 0 : i32
    %39 = arith.cmpi eq, %arg1, %c0_i32_23 : i32
    %40 = arith.extui %39 : i1 to i32
    %c0_i32_24 = arith.constant 0 : i32
    %41 = arith.cmpi ne, %40, %c0_i32_24 : i32
    scf.if %41 {
      %c0_25 = arith.constant 0 : index
      %c0_26 = arith.constant 0 : index
      %42 = vector.load %arg8[%c0_25, %c0_26] : memref<48x1xf32, #tpu.memory_space<vmem>>, vector<48x1xf32>
      %c0_27 = arith.constant 0 : index
      %c0_28 = arith.constant 0 : index
      %43 = vector.load %arg6[%c0_27, %c0_28] : memref<48x1xf32, #tpu.memory_space<vmem>>, vector<48x1xf32>
      tpu.vector_store %arg6[%c0_27, %c0_28], %42 {strides = array<i32>} : memref<48x1xf32, #tpu.memory_space<vmem>>, vector<48x1xf32>,
      %c0_29 = arith.constant 0 : index
      %c0_30 = arith.constant 0 : index
      %44 = vector.load %arg9[%c0_29, %c0_30] : memref<48x1xf32, #tpu.memory_space<vmem>>, vector<48x1xf32>
      %c0_31 = arith.constant 0 : index
      %c0_32 = arith.constant 0 : index
      %45 = vector.load %arg7[%c0_31, %c0_32] : memref<48x1xf32, #tpu.memory_space<vmem>>, vector<48x1xf32>
      tpu.vector_store %arg7[%c0_31, %c0_32], %44 {strides = array<i32>} : memref<48x1xf32, #tpu.memory_space<vmem>>, vector<48x1xf32>,
    } else {
    }
    return
  }
  func.func @transform_0(%arg0: i32, %arg1: i32) -> (i32, i32) {
    %c0_i32 = arith.constant 0 : i32
    return %arg0, %arg1 : i32, i32
  }
  func.func @transform_1(%arg0: i32, %arg1: i32) -> (i32, i32) {
    %c0_i32 = arith.constant 0 : i32
    return %arg0, %arg1 : i32, i32
  }
  func.func @transform_2(%arg0: i32, %arg1: i32) -> (i32, i32) {
    %c0_i32 = arith.constant 0 : i32
    %c0_i32_0 = arith.constant 0 : i32
    return %c0_i32, %arg1 : i32, i32
  }
  func.func @transform_3(%arg0: i32, %arg1: i32) -> (i32, i32) {
    %c0_i32 = arith.constant 0 : i32
    %c0_i32_0 = arith.constant 0 : i32
    return %c0_i32, %arg1 : i32, i32
  }
  func.func @transform_4(%arg0: i32, %arg1: i32) -> (i32, i32) {
    %c0_i32 = arith.constant 0 : i32
    %c0_i32_0 = arith.constant 0 : i32
    return %arg0, %c0_i32 : i32, i32
  }
  func.func @transform_5(%arg0: i32, %arg1: i32) -> (i32, i32) {
    %c0_i32 = arith.constant 0 : i32
    %c0_i32_0 = arith.constant 0 : i32
    return %arg0, %c0_i32 : i32, i32
  }
}

</mosaic_0001>

<llo_original>
// kernel: tpu_custom_call.1
$region0: #{tpu_custom_call.1}
  #allocation0 [shape = 'u32[]', space=smem, size = 0x4, offset = 0x4, fixed_abs, tag = 'smem constant byte address 0x4 - core index']
  #allocation1 [shape = 'u32[144,128]{1,0:T(1,128)}', space=vmem, size = 0x12000, scoped, tag = 'internal scratch']
  #allocation2 [shape = 'f32[48,1]{1,0:T(8,128)}', space=vmem, size = 0x6000, scoped, tag = 'scratch operand']
  #allocation3 [shape = 'f32[48,1]{1,0:T(8,128)}', space=vmem, size = 0x6000, scoped, tag = 'scratch operand']
  %s0 = inlined_call_operand.hbm [shape: f32[48,128], index: 0, kind: input, shape index: {}]
  %s1 = inlined_call_operand.hbm [shape: f32[48,128], index: 1, kind: input, shape index: {}]
  %s2 = inlined_call_operand.vmem [shape: f32[1,128], index: 2, kind: input, shape index: {}]
  %s3 = inlined_call_operand.vmem [shape: f32[1,128], index: 3, kind: input, shape index: {}]
  %s4 = inlined_call_operand.vmem [shape: f32[48,1], index: 4, kind: output, shape index: {0}]
  %s5 = inlined_call_operand.vmem [shape: f32[48,1], index: 5, kind: output, shape index: {1}]
  %6 = xla_tuple %s4, %s5
  %s7 = sld [smem:[#allocation0]]
  $region50: #{tpu_custom_call.1} parent=0
    _
  %s9 = ssub.s32 1, %s7
  %s10 = scalar_select 0, %s9, %s7
  $region1: #{tpu_custom_call.1} parent=0
    #allocation4 [shape = 'u8[24576]{0}', space=vmem, size = 0x6000, scoped, tag = 'input window, operand 0, single buffered']
    #allocation5 [shape = 's32[1]{0}', space=sflag, size = 0x4, scoped, tag = 'scoped memory for tpu_custom_call.1']
    #allocation6 [shape = 'u8[24576]{0}', space=vmem, size = 0x6000, scoped, tag = 'input window, operand 1, single buffered']
    #allocation7 [shape = 's32[1]{0}', space=sflag, size = 0x4, scoped, tag = 'scoped memory for tpu_custom_call.1']
    %11 = vsyncpa [#allocation5], 0
    %12 = vsyncpa [#allocation7], 0
    // Predicated region
    $region2: #{tpu_custom_call.1} parent=1 // pred_check
      _
    $region3: #{tpu_custom_call.1} parent=1 // pred_check_branch
      %14 = sbr.rel (0) target = $region5
    $region4: #{tpu_custom_call.1} parent=1 // pred_region
      %s16 = ssub.s32 768, 768
      %17 = vsyncadd [#allocation5], %s16
      %s18 = sshll.u32 [#allocation4], 4
      %s19 = int_to_ptr.vmem [resolvable:$true] %s18
      %24 = dma.hbm_to_vmem [thread:$0]  %s0, 768, %s19, [#allocation5], 128, 128, 8
    $region5: #{tpu_custom_call.1} parent=1 // pred_fallthru
      _
    // Predicated region
    $region6: #{tpu_custom_call.1} parent=1 // pred_check
      _
    $region7: #{tpu_custom_call.1} parent=1 // pred_check_branch
      %26 = sbr.rel (0) target = $region9
    $region8: #{tpu_custom_call.1} parent=1 // pred_region
      %s28 = ssub.s32 768, 768
      %29 = vsyncadd [#allocation7], %s28
      %s30 = sshll.u32 [#allocation6], 4
      %s31 = int_to_ptr.vmem [resolvable:$true] %s30
      %36 = dma.hbm_to_vmem [thread:$0]  %s1, 768, %s31, [#allocation7], 128, 128, 8
    $region9: #{tpu_custom_call.1} parent=1 // pred_fallthru
      _
    // Predicated region
    $region10: #{tpu_custom_call.1} parent=1 // pred_check
      _
    $region11: #{tpu_custom_call.1} parent=1 // pred_check_branch
      %38 = sbr.rel (0) target = $region13
    $region12: #{tpu_custom_call.1} parent=1 // pred_region
      _
    $region13: #{tpu_custom_call.1} parent=1 // pred_fallthru
      _
    // Predicated region
    $region14: #{tpu_custom_call.1} parent=1 // pred_check
      _
    $region15: #{tpu_custom_call.1} parent=1 // pred_check_branch
      %40 = sbr.rel (0) target = $region17
    $region16: #{tpu_custom_call.1} parent=1 // pred_region
      _
    $region17: #{tpu_custom_call.1} parent=1 // pred_fallthru
      _
    // Predicated region
    $region18: #{tpu_custom_call.1} parent=1 // pred_check
      _
    $region19: #{tpu_custom_call.1} parent=1 // pred_check_branch
      %42 = sbr.rel (0) target = $region21
    $region20: #{tpu_custom_call.1} parent=1 // pred_region
      %43 = dma.done [#allocation5], 768
    $region21: #{tpu_custom_call.1} parent=1 // pred_fallthru
      _
    // Predicated region
    $region22: #{tpu_custom_call.1} parent=1 // pred_check
      _
    $region23: #{tpu_custom_call.1} parent=1 // pred_check_branch
      %45 = sbr.rel (0) target = $region25
    $region24: #{tpu_custom_call.1} parent=1 // pred_region
      %46 = dma.done [#allocation7], 768
    $region25: #{tpu_custom_call.1} parent=1 // pred_fallthru
      _
    %p47 = scmp.eq.s32.totalorder 0, 0
    // Predicated region
    $region26: #{tpu_custom_call.1} parent=1 // pred_check
      %p48 = pneg %p47
    $region27: #{tpu_custom_call.1} parent=1 // pred_check_branch
      %50 = sbr.rel (%p48) target = $region29
    $region28: #{tpu_custom_call.1} parent=1 // pred_region
      %vm51 = vcmask 7168
      %52 = vst.msk [vmem:[#allocation2] sm:$0xff] %vm51, 0.0
      %53 = vst.msk [vmem:[#allocation2 + $0x8] sm:$0xff] %vm51, 0.0
      %54 = vst.msk [vmem:[#allocation2 + $0x10] sm:$0xff] %vm51, 0.0
      %55 = vst.msk [vmem:[#allocation2 + $0x18] sm:$0xff] %vm51, 0.0
      %56 = vst.msk [vmem:[#allocation2 + $0x20] sm:$0xff] %vm51, 0.0
      %57 = vst.msk [vmem:[#allocation2 + $0x28] sm:$0xff] %vm51, 0.0
      %58 = vst.msk [vmem:[#allocation3] sm:$0xff] %vm51, 0.0
      %59 = vst.msk [vmem:[#allocation3 + $0x8] sm:$0xff] %vm51, 0.0
      %60 = vst.msk [vmem:[#allocation3 + $0x10] sm:$0xff] %vm51, 0.0
      %61 = vst.msk [vmem:[#allocation3 + $0x18] sm:$0xff] %vm51, 0.0
      %62 = vst.msk [vmem:[#allocation3 + $0x20] sm:$0xff] %vm51, 0.0
      %63 = vst.msk [vmem:[#allocation3 + $0x28] sm:$0xff] %vm51, 0.0
    $region29: #{tpu_custom_call.1} parent=1 // pred_fallthru
      _
    %v64 = vld [vmem:[#allocation4] sm:$0xff]
    %v65 = vld [vmem:[#allocation4 + $0x8] sm:$0xff]
    %v66 = vld [vmem:[#allocation4 + $0x10] sm:$0xff]
    %v67 = vld [vmem:[#allocation4 + $0x18] sm:$0xff]
    %v68 = vld [vmem:[#allocation4 + $0x20] sm:$0xff]
    %v69 = vld [vmem:[#allocation4 + $0x28] sm:$0xff]
    %v70 = vld [vmem:[#allocation6] sm:$0xff]
    %v71 = vld [vmem:[#allocation6 + $0x8] sm:$0xff]
    %v72 = vld [vmem:[#allocation6 + $0x10] sm:$0xff]
    %v73 = vld [vmem:[#allocation6 + $0x18] sm:$0xff]
    %v74 = vld [vmem:[#allocation6 + $0x20] sm:$0xff]
    %v75 = vld [vmem:[#allocation6 + $0x28] sm:$0xff]
    %v76 = vld [vmem:[%s2] sm:$0x1]
    %v77 = vld [vmem:[%s3] sm:$0x1]
    %v78 = vld [vmem:[#allocation2] sm:$0xff]
    %v79 = vld [vmem:[#allocation2 + $0x8] sm:$0xff]
    %v80 = vld [vmem:[#allocation2 + $0x10] sm:$0xff]
    %v81 = vld [vmem:[#allocation2 + $0x18] sm:$0xff]
    %v82 = vld [vmem:[#allocation2 + $0x20] sm:$0xff]
    %v83 = vld [vmem:[#allocation2 + $0x28] sm:$0xff]
    %v84 = vmax.f32 %v64, 0.0
    %v85 = vmax.f32 %v65, 0.0
    %v86 = vmax.f32 %v66, 0.0
    %v87 = vmax.f32 %v67, 0.0
    %v88 = vmax.f32 %v68, 0.0
    %v89 = vmax.f32 %v69, 0.0
    %v91 = vlaneseq
    %v92 = vshrl.u32 %v91, 7
    %v93 = vsub.s32 0, %v92
    %v94 = vrot.slane %v76, %v93
    %v96 = vmul.f32 %v84, %v94
    %v97 = vmul.f32 %v85, %v94
    %v98 = vmul.f32 %v86, %v94
    %v99 = vmul.f32 %v87, %v94
    %v100 = vmul.f32 %v88, %v94
    %v101 = vmul.f32 %v89, %v94
    %v102 = vsub.f32 0.0, %v64
    %v103 = vsub.f32 0.0, %v65
    %v104 = vsub.f32 0.0, %v66
    %v105 = vsub.f32 0.0, %v67
    %v106 = vsub.f32 0.0, %v68
    %v107 = vsub.f32 0.0, %v69
    %v108 = vmax.f32 %v102, 0.0
    %v109 = vmax.f32 %v103, 0.0
    %v110 = vmax.f32 %v104, 0.0
    %v111 = vmax.f32 %v105, 0.0
    %v112 = vmax.f32 %v106, 0.0
    %v113 = vmax.f32 %v107, 0.0
    %v115 = vlaneseq
    %v116 = vshrl.u32 %v115, 7
    %v117 = vsub.s32 0, %v116
    %v118 = vrot.slane %v77, %v117
    %v120 = vmul.f32 %v108, %v118
    %v121 = vmul.f32 %v109, %v118
    %v122 = vmul.f32 %v110, %v118
    %v123 = vmul.f32 %v111, %v118
    %v124 = vmul.f32 %v112, %v118
    %v125 = vmul.f32 %v113, %v118
    %v126 = vsub.f32 %v96, %v120
    %v127 = vsub.f32 %v97, %v121
    %v128 = vsub.f32 %v98, %v122
    %v129 = vsub.f32 %v99, %v123
    %v130 = vsub.f32 %v100, %v124
    %v131 = vsub.f32 %v101, %v125
    %132 = vadd.xlane.f32.xlu0 %v126
    %v133 = vpop.xlane.xlu0 %132
    %134 = vadd.xlane.f32.xlu0 %v127
    %v135 = vpop.xlane.xlu0 %134
    %136 = vadd.xlane.f32.xlu0 %v128
    %v137 = vpop.xlane.xlu0 %136
    %138 = vadd.xlane.f32.xlu0 %v129
    %v139 = vpop.xlane.xlu0 %138
    %140 = vadd.xlane.f32.xlu0 %v130
    %v141 = vpop.xlane.xlu0 %140
    %142 = vadd.xlane.f32.xlu0 %v131
    %v143 = vpop.xlane.xlu0 %142
    %v144 = vadd.f32 %v78, %v133
    %v145 = vadd.f32 %v79, %v135
    %v146 = vadd.f32 %v80, %v137
    %v147 = vadd.f32 %v81, %v139
    %v148 = vadd.f32 %v82, %v141
    %v149 = vadd.f32 %v83, %v143
    %vm150 = vcmask 7168
    %151 = vst.msk [vmem:[#allocation2] sm:$0xff] %vm150, %v144
    %152 = vst.msk [vmem:[#allocation2 + $0x8] sm:$0xff] %vm150, %v145
    %153 = vst.msk [vmem:[#allocation2 + $0x10] sm:$0xff] %vm150, %v146
    %154 = vst.msk [vmem:[#allocation2 + $0x18] sm:$0xff] %vm150, %v147
    %155 = vst.msk [vmem:[#allocation2 + $0x20] sm:$0xff] %vm150, %v148
    %156 = vst.msk [vmem:[#allocation2 + $0x28] sm:$0xff] %vm150, %v149
    %v157 = vld [vmem:[#allocation3] sm:$0xff]
    %v158 = vld [vmem:[#allocation3 + $0x8] sm:$0xff]
    %v159 = vld [vmem:[#allocation3 + $0x10] sm:$0xff]
    %v160 = vld [vmem:[#allocation3 + $0x18] sm:$0xff]
    %v161 = vld [vmem:[#allocation3 + $0x20] sm:$0xff]
    %v162 = vld [vmem:[#allocation3 + $0x28] sm:$0xff]
    %v163 = vmax.f32 %v70, 0.0
    %v164 = vmax.f32 %v71, 0.0
    %v165 = vmax.f32 %v72, 0.0
    %v166 = vmax.f32 %v73, 0.0
    %v167 = vmax.f32 %v74, 0.0
    %v168 = vmax.f32 %v75, 0.0
    %v169 = vmul.f32 %v163, %v118
    %v170 = vmul.f32 %v164, %v118
    %v171 = vmul.f32 %v165, %v118
    %v172 = vmul.f32 %v166, %v118
    %v173 = vmul.f32 %v167, %v118
    %v174 = vmul.f32 %v168, %v118
    %v175 = vsub.f32 0.0, %v70
    %v176 = vsub.f32 0.0, %v71
    %v177 = vsub.f32 0.0, %v72
    %v178 = vsub.f32 0.0, %v73
    %v179 = vsub.f32 0.0, %v74
    %v180 = vsub.f32 0.0, %v75
    %v181 = vmax.f32 %v175, 0.0
    %v182 = vmax.f32 %v176, 0.0
    %v183 = vmax.f32 %v177, 0.0
    %v184 = vmax.f32 %v178, 0.0
    %v185 = vmax.f32 %v179, 0.0
    %v186 = vmax.f32 %v180, 0.0
    %v187 = vmul.f32 %v181, %v94
    %v188 = vmul.f32 %v182, %v94
    %v189 = vmul.f32 %v183, %v94
    %v190 = vmul.f32 %v184, %v94
    %v191 = vmul.f32 %v185, %v94
    %v192 = vmul.f32 %v186, %v94
    %v193 = vsub.f32 %v169, %v187
    %v194 = vsub.f32 %v170, %v188
    %v195 = vsub.f32 %v171, %v189
    %v196 = vsub.f32 %v172, %v190
    %v197 = vsub.f32 %v173, %v191
    %v198 = vsub.f32 %v174, %v192
    %199 = vadd.xlane.f32.xlu0 %v193
    %v200 = vpop.xlane.xlu0 %199
    %201 = vadd.xlane.f32.xlu0 %v194
    %v202 = vpop.xlane.xlu0 %201
    %203 = vadd.xlane.f32.xlu0 %v195
    %v204 = vpop.xlane.xlu0 %203
    %205 = vadd.xlane.f32.xlu0 %v196
    %v206 = vpop.xlane.xlu0 %205
    %207 = vadd.xlane.f32.xlu0 %v197
    %v208 = vpop.xlane.xlu0 %207
    %209 = vadd.xlane.f32.xlu0 %v198
    %v210 = vpop.xlane.xlu0 %209
    %v211 = vadd.f32 %v157, %v200
    %v212 = vadd.f32 %v158, %v202
    %v213 = vadd.f32 %v159, %v204
    %v214 = vadd.f32 %v160, %v206
    %v215 = vadd.f32 %v161, %v208
    %v216 = vadd.f32 %v162, %v210
    %217 = vst.msk [vmem:[#allocation3] sm:$0xff] %vm150, %v211
    %218 = vst.msk [vmem:[#allocation3 + $0x8] sm:$0xff] %vm150, %v212
    %219 = vst.msk [vmem:[#allocation3 + $0x10] sm:$0xff] %vm150, %v213
    %220 = vst.msk [vmem:[#allocation3 + $0x18] sm:$0xff] %vm150, %v214
    %221 = vst.msk [vmem:[#allocation3 + $0x20] sm:$0xff] %vm150, %v215
    %222 = vst.msk [vmem:[#allocation3 + $0x28] sm:$0xff] %vm150, %v216
    // Predicated region
    $region30: #{tpu_custom_call.1} parent=1 // pred_check
      %p223 = pneg %p47
    $region31: #{tpu_custom_call.1} parent=1 // pred_check_branch
      %225 = sbr.rel (%p223) target = $region33
    $region32: #{tpu_custom_call.1} parent=1 // pred_region
      %v226 = vld [vmem:[#allocation2] sm:$0xff]
      %v227 = vld [vmem:[#allocation2 + $0x8] sm:$0xff]
      %v228 = vld [vmem:[#allocation2 + $0x10] sm:$0xff]
      %v229 = vld [vmem:[#allocation2 + $0x18] sm:$0xff]
      %v230 = vld [vmem:[#allocation2 + $0x20] sm:$0xff]
      %v231 = vld [vmem:[#allocation2 + $0x28] sm:$0xff]
      %232 = vst.msk [vmem:[%s4] sm:$0xff] %vm150, %v226
      %233 = vst.msk [vmem:[%s4 + $0x8] sm:$0xff] %vm150, %v227
      %234 = vst.msk [vmem:[%s4 + $0x10] sm:$0xff] %vm150, %v228
      %235 = vst.msk [vmem:[%s4 + $0x18] sm:$0xff] %vm150, %v229
      %236 = vst.msk [vmem:[%s4 + $0x20] sm:$0xff] %vm150, %v230
      %237 = vst.msk [vmem:[%s4 + $0x28] sm:$0xff] %vm150, %v231
      %v238 = vld [vmem:[#allocation3] sm:$0xff]
      %v239 = vld [vmem:[#allocation3 + $0x8] sm:$0xff]
      %v240 = vld [vmem:[#allocation3 + $0x10] sm:$0xff]
      %v241 = vld [vmem:[#allocation3 + $0x18] sm:$0xff]
      %v242 = vld [vmem:[#allocation3 + $0x20] sm:$0xff]
      %v243 = vld [vmem:[#allocation3 + $0x28] sm:$0xff]
      %244 = vst.msk [vmem:[%s5] sm:$0xff] %vm150, %v238
      %245 = vst.msk [vmem:[%s5 + $0x8] sm:$0xff] %vm150, %v239
      %246 = vst.msk [vmem:[%s5 + $0x10] sm:$0xff] %vm150, %v240
      %247 = vst.msk [vmem:[%s5 + $0x18] sm:$0xff] %vm150, %v241
      %248 = vst.msk [vmem:[%s5 + $0x20] sm:$0xff] %vm150, %v242
      %249 = vst.msk [vmem:[%s5 + $0x28] sm:$0xff] %vm150, %v243
    $region33: #{tpu_custom_call.1} parent=1 // pred_fallthru
      _
    // Predicated region
    $region34: #{tpu_custom_call.1} parent=1 // pred_check
      _
    $region35: #{tpu_custom_call.1} parent=1 // pred_check_branch
      %251 = sbr.rel (0) target = $region37
    $region36: #{tpu_custom_call.1} parent=1 // pred_region
      _
    $region37: #{tpu_custom_call.1} parent=1 // pred_fallthru
      _
    // Predicated region
    $region38: #{tpu_custom_call.1} parent=1 // pred_check
      _
    $region39: #{tpu_custom_call.1} parent=1 // pred_check_branch
      %253 = sbr.rel (0) target = $region41
    $region40: #{tpu_custom_call.1} parent=1 // pred_region
      _
    $region41: #{tpu_custom_call.1} parent=1 // pred_fallthru
      _
    // Predicated region
    $region42: #{tpu_custom_call.1} parent=1 // pred_check
      _
    $region43: #{tpu_custom_call.1} parent=1 // pred_check_branch
      %255 = sbr.rel (0) target = $region45
    $region44: #{tpu_custom_call.1} parent=1 // pred_region
      _
    $region45: #{tpu_custom_call.1} parent=1 // pred_fallthru
      _
    // Predicated region
    $region46: #{tpu_custom_call.1} parent=1 // pred_check
      _
    $region47: #{tpu_custom_call.1} parent=1 // pred_check_branch
      %257 = sbr.rel (0) target = $region49
    $region48: #{tpu_custom_call.1} parent=1 // pred_region
      _
    $region49: #{tpu_custom_call.1} parent=1 // pred_fallthru
      _
    %258 = vsyncpa [#allocation5], 1
    %259 = vsyncpa [#allocation7], 1

</llo_original>
